<compile_context>
chip_gen: v5e
topology: v5e:2x2
jax: 0.10.0
libtpu: 0.0.40
codegen_flags: <defaults>
</compile_context>

<pallas_src>
import jax
import jax.numpy as jnp
from jax import lax
from jax.experimental import pallas as pl
from jax.experimental.pallas import tpu as pltpu


def _round_up(n, m):
    return ((n + m - 1) // m) * m


def _linear_kernel(x_ref, w_ref, b_ref, o_ref):
    # MXU matmul with f32 accumulation (HIGHEST = full-f32 parity with torch),
    # then broadcasted bias add on the VPU.
    acc = jnp.dot(
        x_ref[...],
        w_ref[...],
        preferred_element_type=jnp.float32,
        precision=lax.Precision.HIGHEST,
    )
    o_ref[...] = (acc + b_ref[...]).astype(o_ref.dtype)


def _choose_batch_tile(
    batch,
    d_in,
    out_w,
    tile_b=None,
    *,
    vmem_budget_bytes=16 << 20,   # conservative: fits default scoped VMEM on v5e
    target_step_bytes=4 << 20,    # ~4 MiB of x per grid step (amortize step cost)
    min_steps=4,                  # let the parallel axis split across TCs (v7x)
):
    # Double-buffered f32 x tile + out tile per row, plus resident weight/bias.
    bytes_per_row = 4 * (d_in + out_w)
    resident = 4 * (d_in + 1) * out_w
    cap_vmem = max((vmem_budget_bytes - 2 * resident) // (2 * bytes_per_row), 8)
    cap_bw = max(target_step_bytes // (4 * d_in), 512)
    cap_split = _round_up(pl.cdiv(batch, min_steps), 8)
    tb = min(cap_vmem, cap_bw, cap_split, _round_up(batch, 8))
    if tile_b is not None:
        tb = min(tb, int(tile_b))
    # Force multiple of 8 sublanes (round down so VMEM/bw caps are respected).
    return max(8, (tb // 8) * 8)


def descripancy_net_forward(x, w, b, *, tile_b=None):
    """Pallas equivalent of DescripancyNet.forward: d = control1(x).

    x: (B, D_in) float32
    w: (D_out, D_in) float32   (PyTorch nn.Linear weight layout)
    b: (D_out,)   float32
    returns (B, D_out) float32
    """
    B, d_in = x.shape
    d_out = w.shape[0]
    out_w = _round_up(max(d_out, 1), 8)   # 6 -> 8 padded output lanes

    # Weight transposed + zero-padded to 8 output columns; bias likewise.
    w_t = jnp.zeros((d_in, out_w), x.dtype).at[:, :d_out].set(w.T.astype(x.dtype))
    b_p = jnp.zeros((1, out_w), x.dtype).at[:, :d_out].set(
        b.reshape(1, -1).astype(x.dtype)
    )

    tb = _choose_batch_tile(B, d_in, out_w, tile_b)
    grid = (pl.cdiv(B, tb),)   # ragged last block handled by Pallas; no jnp.pad copy

    out = pl.pallas_call(
        _linear_kernel,
        out_shape=jax.ShapeDtypeStruct((B, out_w), x.dtype),
        grid=grid,
        in_specs=[
            pl.BlockSpec((tb, d_in), lambda i: (i, 0)),      # streamed x tiles
            pl.BlockSpec((d_in, out_w), lambda i: (0, 0)),   # resident weight
            pl.BlockSpec((1, out_w), lambda i: (0, 0)),      # resident bias
        ],
        out_specs=pl.BlockSpec((tb, out_w), lambda i: (i, 0)),
        compiler_params=pltpu.CompilerParams(
            dimension_semantics=(pltpu.PARALLEL,),
            vmem_limit_bytes=32 << 20,
        ),
    )(x, w_t, b_p)

    # Drop the 2 padded output lanes outside the kernel.
    return out[:, :d_out]


def init_params(key, d_in, d_out=6):
    # Deterministic init mimicking torch.nn.Linear: U(-1/sqrt(D_in), 1/sqrt(D_in)).
    kw, kb = jax.random.split(key)
    bound = 1.0 / jnp.sqrt(jnp.float32(d_in))
    w = jax.random.uniform(kw, (d_out, d_in), jnp.float32, -bound, bound)
    b = jax.random.uniform(kb, (d_out,), jnp.float32, -bound, bound)
    return w, b


if __name__ == "__main__":
    key = jax.random.PRNGKey(0)
    k_x, k_p = jax.random.split(key)

    B, D_in = 8, 32
    x = jax.random.normal(k_x, (B, D_in), jnp.float32)
    w, b = init_params(k_p, D_in)

    out = jax.block_until_ready(descripancy_net_forward(x, w, b))

    # Reference of the PyTorch fp32 Linear semantics (full-precision matmul).
    ref = jnp.dot(x, w.T, precision=lax.Precision.HIGHEST) + b
    assert out.shape == (B, 6)
    assert jnp.allclose(out, ref, atol=1e-5, rtol=1e-5)

    # Ragged-batch path: B not a multiple of the tile, no wrapper-side padding.
    B2 = 1037
    x2 = jax.random.normal(jax.random.PRNGKey(1), (B2, D_in), jnp.float32)
    out2 = jax.block_until_ready(descripancy_net_forward(x2, w, b))
    ref2 = jnp.dot(x2, w.T, precision=lax.Precision.HIGHEST) + b
    assert out2.shape == (B2, 6)
    assert jnp.allclose(out2, ref2, atol=1e-5, rtol=1e-5)

    print("KERNEL_OK")
</pallas_src>

<mosaic_0001>
module attributes {stable_mosaic.version = 11 : i64} {
  func.func @_linear_kernel(%arg0: i32, %arg1: memref<8x32xf32, #tpu.memory_space<vmem>>, %arg2: memref<32x8xf32, #tpu.memory_space<vmem>>, %arg3: memref<1x8xf32, #tpu.memory_space<vmem>>, %arg4: memref<8x8xf32, #tpu.memory_space<vmem>>) attributes {dimension_semantics = [#tpu.dimension_semantics<parallel>], iteration_bounds = array<i64: 1>, scalar_prefetch = 0 : i64, scratch_operands = 0 : i64, tpu.core_type = #tpu.core_type<tc>, window_params = [{transform_indices = @transform_0, window_bounds = array<i64: 8, 32>}, {pipeline_mode = #tpu.pipeline_mode<synchronous>, transform_indices = @transform_1, window_bounds = array<i64: 32, 8>}, {pipeline_mode = #tpu.pipeline_mode<synchronous>, transform_indices = @transform_2, window_bounds = array<i64: 1, 8>}, {transform_indices = @transform_3, window_bounds = array<i64: 8, 8>}]} {
    %c0 = arith.constant 0 : index
    %c0_0 = arith.constant 0 : index
    %0 = vector.load %arg1[%c0, %c0_0] : memref<8x32xf32, #tpu.memory_space<vmem>>, vector<8x32xf32>
    %c0_1 = arith.constant 0 : index
    %c0_2 = arith.constant 0 : index
    %1 = vector.load %arg2[%c0_1, %c0_2] : memref<32x8xf32, #tpu.memory_space<vmem>>, vector<32x8xf32>
    %cst = arith.constant dense<0.000000e+00> : vector<8x8xf32>
    %2 = tpu.matmul %0, %1, %cst {dimension_numbers = #tpu.dot_dimension_numbers<[1], [0], [0], [1], [0, 0, 1, 1], [], []>, precision = #tpu.contract_precision<fp32>} : vector<8x32xf32>, vector<32x8xf32>, vector<8x8xf32> -> vector<8x8xf32>
    %c0_3 = arith.constant 0 : index
    %c0_4 = arith.constant 0 : index
    %3 = vector.load %arg3[%c0_3, %c0_4] : memref<1x8xf32, #tpu.memory_space<vmem>>, vector<1x8xf32>
    %4 = vector.broadcast %3 : vector<1x8xf32> to vector<8x8xf32>
    %5 = arith.addf %2, %4 : vector<8x8xf32>
    %c0_5 = arith.constant 0 : index
    %c0_6 = arith.constant 0 : index
    %6 = vector.load %arg4[%c0_5, %c0_6] : memref<8x8xf32, #tpu.memory_space<vmem>>, vector<8x8xf32>
    tpu.vector_store %arg4[%c0_5, %c0_6], %5 {strides = array<i32>} : memref<8x8xf32, #tpu.memory_space<vmem>>, vector<8x8xf32>,
    return
  }
  func.func @transform_0(%arg0: i32) -> (i32, i32) {
    %c0_i32 = arith.constant 0 : i32
    %c0_i32_0 = arith.constant 0 : i32
    return %arg0, %c0_i32 : i32, i32
  }
  func.func @transform_1(%arg0: i32) -> (i32, i32) {
    %c0_i32 = arith.constant 0 : i32
    %c0_i32_0 = arith.constant 0 : i32
    %c0_i32_1 = arith.constant 0 : i32
    return %c0_i32, %c0_i32_0 : i32, i32
  }
  func.func @transform_2(%arg0: i32) -> (i32, i32) {
    %c0_i32 = arith.constant 0 : i32
    %c0_i32_0 = arith.constant 0 : i32
    %c0_i32_1 = arith.constant 0 : i32
    return %c0_i32, %c0_i32_0 : i32, i32
  }
  func.func @transform_3(%arg0: i32) -> (i32, i32) {
    %c0_i32 = arith.constant 0 : i32
    %c0_i32_0 = arith.constant 0 : i32
    return %arg0, %c0_i32 : i32, i32
  }
}

</mosaic_0001>

<llo_original>
// kernel: tpu_custom_call.1
$region0: #{tpu_custom_call.1}
  #allocation0 [shape = 'u32[]', space=smem, size = 0x4, offset = 0x4, fixed_abs, tag = 'smem constant byte address 0x4 - core index']
  #allocation1 [shape = 'u32[72,128]{1,0:T(1,128)}', space=vmem, size = 0x9000, scoped, tag = 'internal scratch']
  %s0 = inlined_call_operand.vmem [shape: f32[8,32], index: 0, kind: input, shape index: {}]
  %s1 = inlined_call_operand.vmem [shape: f32[32,8], index: 1, kind: input, shape index: {}]
  %s2 = inlined_call_operand.vmem [shape: f32[1,8], index: 2, kind: input, shape index: {}]
  %s3 = inlined_call_operand.hbm [shape: f32[8,8], index: 3, kind: output, shape index: {}]
  %s4 = sld [smem:[#allocation0]]
  $region22: #{tpu_custom_call.1} parent=0
    _
  %s6 = ssub.s32 1, %s4
  %s7 = scalar_select 0, %s6, %s4
  $region1: #{tpu_custom_call.1} parent=0
    #allocation2 [shape = 'u8[4096]{0}', space=vmem, size = 0x1000, scoped, tag = 'output window, operand 0, single buffered']
    #allocation3 [shape = 's32[1]{0}', space=sflag, size = 0x4, scoped, tag = 'scoped memory for tpu_custom_call.1']
    %8 = vsyncpa [#allocation3], 0
    // Predicated region
    $region2: #{tpu_custom_call.1} parent=1 // pred_check
      _
    $region3: #{tpu_custom_call.1} parent=1 // pred_check_branch
      %10 = sbr.rel (0) target = $region5
    $region4: #{tpu_custom_call.1} parent=1 // pred_region
      _
    $region5: #{tpu_custom_call.1} parent=1 // pred_fallthru
      _
    // Predicated region
    $region6: #{tpu_custom_call.1} parent=1 // pred_check
      _
    $region7: #{tpu_custom_call.1} parent=1 // pred_check_branch
      %12 = sbr.rel (0) target = $region9
    $region8: #{tpu_custom_call.1} parent=1 // pred_region
      _
    $region9: #{tpu_custom_call.1} parent=1 // pred_fallthru
      _
    // Predicated region
    $region10: #{tpu_custom_call.1} parent=1 // pred_check
      _
    $region11: #{tpu_custom_call.1} parent=1 // pred_check_branch
      %14 = sbr.rel (0) target = $region13
    $region12: #{tpu_custom_call.1} parent=1 // pred_region
      _
    $region13: #{tpu_custom_call.1} parent=1 // pred_fallthru
      _
    %v15 = vld [vmem:[%s0] sm:$0xff]
    %v16 = vld [vmem:[%s1] sm:$0xff]
    %v17 = vld [vmem:[%s1 + $0x8] sm:$0xff]
    %v18 = vld [vmem:[%s1 + $0x10] sm:$0xff]
    %v19 = vld [vmem:[%s1 + $0x18] sm:$0xff]
    %v20 = vld [vmem:[%s2] sm:$0x1]
    %v22 = vperm.slane %v20, 0
    %vm24 = vcmask 261120
    %v26 = vsel %vm24, %v15, 0
    %28 = vmatpush.msra.mxu0 0.0
    %29 = vmatpush.msra.mxu0 0.0
    %30 = vmatpush.msra.mxu0 0.0
    %31 = vmatpush.msra.mxu0 0.0
    %32 = vmatpush.msra.mxu0 0.0
    %33 = vmatpush.msra.mxu0 0.0
    %34 = vmatpush.msra.mxu0 0.0
    %35 = vmatpush.msra.mxu0 0.0
    %36 = vmatpush.msra.mxu0 0.0
    %37 = vmatpush.msra.mxu0 0.0
    %38 = vmatpush.msra.mxu0 0.0
    %39 = vmatpush.msra.mxu0 0.0
    %v40 = vand.u32 %v19, 4294901760
    %41 = vmatpush.msra.mxu0 %v40
    %v42 = vand.u32 %v18, 4294901760
    %43 = vmatpush.msra.mxu0 %v42
    %v44 = vand.u32 %v17, 4294901760
    %45 = vmatpush.msra.mxu0 %v44
    %v46 = vand.u32 %v16, 4294901760
    %47 = vmatpush.msra.mxu0 %v46
    %v48 = vand.u32 %v26, 4294901760
    %v49 = vsub.f32 %v26, %v48
    %v50 = vand.u32 %v49, 4294901760
    %v51 = vsub.f32 %v49, %v50
    %v52 = vand.u32 %v51, 4294901760
    %53 = vmatmul.f32.gmra.mxu0 %v52
    %v54 = vpop.f32.mrf.mxu0
    %v55 = vadd.f32 %v22, %v54
    %56 = vdwg.mxu0
    %57 = vmatpush.msra.mxu0 0.0
    %58 = vmatpush.msra.mxu0 0.0
    %59 = vmatpush.msra.mxu0 0.0
    %60 = vmatpush.msra.mxu0 0.0
    %61 = vmatpush.msra.mxu0 0.0
    %62 = vmatpush.msra.mxu0 0.0
    %63 = vmatpush.msra.mxu0 0.0
    %64 = vmatpush.msra.mxu0 0.0
    %65 = vmatpush.msra.mxu0 0.0
    %66 = vmatpush.msra.mxu0 0.0
    %67 = vmatpush.msra.mxu0 0.0
    %68 = vmatpush.msra.mxu0 0.0
    %v69 = vand.u32 %v19, 4294901760
    %v70 = vsub.f32 %v19, %v69
    %v71 = vand.u32 %v70, 4294901760
    %v72 = vsub.f32 %v70, %v71
    %v73 = vand.u32 %v72, 4294901760
    %74 = vmatpush.msra.mxu0 %v73
    %v75 = vand.u32 %v18, 4294901760
    %v76 = vsub.f32 %v18, %v75
    %v77 = vand.u32 %v76, 4294901760
    %v78 = vsub.f32 %v76, %v77
    %v79 = vand.u32 %v78, 4294901760
    %80 = vmatpush.msra.mxu0 %v79
    %v81 = vand.u32 %v17, 4294901760
    %v82 = vsub.f32 %v17, %v81
    %v83 = vand.u32 %v82, 4294901760
    %v84 = vsub.f32 %v82, %v83
    %v85 = vand.u32 %v84, 4294901760
    %86 = vmatpush.msra.mxu0 %v85
    %v87 = vand.u32 %v16, 4294901760
    %v88 = vsub.f32 %v16, %v87
    %v89 = vand.u32 %v88, 4294901760
    %v90 = vsub.f32 %v88, %v89
    %v91 = vand.u32 %v90, 4294901760
    %92 = vmatpush.msra.mxu0 %v91
    %v93 = vand.u32 %v26, 4294901760
    %94 = vmatmul.f32.gmra.mxu0 %v93
    %v95 = vpop.f32.mrf.mxu0
    %v96 = vadd.f32 %v55, %v95
    %97 = vdwg.mxu0
    %98 = vmatpush.msra.mxu0 0.0
    %99 = vmatpush.msra.mxu0 0.0
    %100 = vmatpush.msra.mxu0 0.0
    %101 = vmatpush.msra.mxu0 0.0
    %102 = vmatpush.msra.mxu0 0.0
    %103 = vmatpush.msra.mxu0 0.0
    %104 = vmatpush.msra.mxu0 0.0
    %105 = vmatpush.msra.mxu0 0.0
    %106 = vmatpush.msra.mxu0 0.0
    %107 = vmatpush.msra.mxu0 0.0
    %108 = vmatpush.msra.mxu0 0.0
    %109 = vmatpush.msra.mxu0 0.0
    %v110 = vand.u32 %v19, 4294901760
    %v111 = vsub.f32 %v19, %v110
    %112 = vmatpush.msra.mxu0 %v111
    %v113 = vand.u32 %v18, 4294901760
    %v114 = vsub.f32 %v18, %v113
    %115 = vmatpush.msra.mxu0 %v114
    %v116 = vand.u32 %v17, 4294901760
    %v117 = vsub.f32 %v17, %v116
    %118 = vmatpush.msra.mxu0 %v117
    %v119 = vand.u32 %v16, 4294901760
    %v120 = vsub.f32 %v16, %v119
    %121 = vmatpush.msra.mxu0 %v120
    %v122 = vand.u32 %v26, 4294901760
    %v123 = vsub.f32 %v26, %v122
    %124 = vmatmul.f32.gmra.mxu0 %v123
    %v125 = vpop.f32.mrf.mxu0
    %v126 = vadd.f32 %v96, %v125
    %127 = vdwg.mxu0
    %128 = vmatpush.msra.mxu0 0.0
    %129 = vmatpush.msra.mxu0 0.0
    %130 = vmatpush.msra.mxu0 0.0
    %131 = vmatpush.msra.mxu0 0.0
    %132 = vmatpush.msra.mxu0 0.0
    %133 = vmatpush.msra.mxu0 0.0
    %134 = vmatpush.msra.mxu0 0.0
    %135 = vmatpush.msra.mxu0 0.0
    %136 = vmatpush.msra.mxu0 0.0
    %137 = vmatpush.msra.mxu0 0.0
    %138 = vmatpush.msra.mxu0 0.0
    %139 = vmatpush.msra.mxu0 0.0
    %v140 = vand.u32 %v19, 4294901760
    %141 = vmatpush.msra.mxu0 %v140
    %v142 = vand.u32 %v18, 4294901760
    %143 = vmatpush.msra.mxu0 %v142
    %v144 = vand.u32 %v17, 4294901760
    %145 = vmatpush.msra.mxu0 %v144
    %v146 = vand.u32 %v16, 4294901760
    %147 = vmatpush.msra.mxu0 %v146
    %v148 = vand.u32 %v26, 4294901760
    %v149 = vsub.f32 %v26, %v148
    %v150 = vand.u32 %v149, 4294901760
    %151 = vmatmul.f32.gmra.mxu0 %v150
    %v152 = vpop.f32.mrf.mxu0
    %v153 = vadd.f32 %v126, %v152
    %154 = vdwg.mxu0
    %155 = vmatpush.msra.mxu0 0.0
    %156 = vmatpush.msra.mxu0 0.0
    %157 = vmatpush.msra.mxu0 0.0
    %158 = vmatpush.msra.mxu0 0.0
    %159 = vmatpush.msra.mxu0 0.0
    %160 = vmatpush.msra.mxu0 0.0
    %161 = vmatpush.msra.mxu0 0.0
    %162 = vmatpush.msra.mxu0 0.0
    %163 = vmatpush.msra.mxu0 0.0
    %164 = vmatpush.msra.mxu0 0.0
    %165 = vmatpush.msra.mxu0 0.0
    %166 = vmatpush.msra.mxu0 0.0
    %v167 = vand.u32 %v19, 4294901760
    %v168 = vsub.f32 %v19, %v167
    %v169 = vand.u32 %v168, 4294901760
    %170 = vmatpush.msra.mxu0 %v169
    %v171 = vand.u32 %v18, 4294901760
    %v172 = vsub.f32 %v18, %v171
    %v173 = vand.u32 %v172, 4294901760
    %174 = vmatpush.msra.mxu0 %v173
    %v175 = vand.u32 %v17, 4294901760
    %v176 = vsub.f32 %v17, %v175
    %v177 = vand.u32 %v176, 4294901760
    %178 = vmatpush.msra.mxu0 %v177
    %v179 = vand.u32 %v16, 4294901760
    %v180 = vsub.f32 %v16, %v179
    %v181 = vand.u32 %v180, 4294901760
    %182 = vmatpush.msra.mxu0 %v181
    %v183 = vand.u32 %v26, 4294901760
    %184 = vmatmul.f32.gmra.mxu0 %v183
    %v185 = vpop.f32.mrf.mxu0
    %v186 = vadd.f32 %v153, %v185
    %187 = vdwg.mxu0
    %188 = vmatpush.msra.mxu0 0.0
    %189 = vmatpush.msra.mxu0 0.0
    %190 = vmatpush.msra.mxu0 0.0
    %191 = vmatpush.msra.mxu0 0.0
    %192 = vmatpush.msra.mxu0 0.0
    %193 = vmatpush.msra.mxu0 0.0
    %194 = vmatpush.msra.mxu0 0.0
    %195 = vmatpush.msra.mxu0 0.0
    %196 = vmatpush.msra.mxu0 0.0
    %197 = vmatpush.msra.mxu0 0.0
    %198 = vmatpush.msra.mxu0 0.0
    %199 = vmatpush.msra.mxu0 0.0
    %v200 = vand.u32 %v19, 4294901760
    %201 = vmatpush.msra.mxu0 %v200
    %v202 = vand.u32 %v18, 4294901760
    %203 = vmatpush.msra.mxu0 %v202
    %v204 = vand.u32 %v17, 4294901760
    %205 = vmatpush.msra.mxu0 %v204
    %v206 = vand.u32 %v16, 4294901760
    %207 = vmatpush.msra.mxu0 %v206
    %v208 = vand.u32 %v26, 4294901760
    %209 = vmatmul.f32.gmra.mxu0 %v208
    %v210 = vpop.f32.mrf.mxu0
    %v211 = vadd.f32 %v186, %v210
    %212 = vdwg.mxu0
    %vm213 = vcmask 64512
    %214 = vst.msk [vmem:[#allocation2] sm:$0xff] %vm213, %v211
    // Predicated region
    $region14: #{tpu_custom_call.1} parent=1 // pred_check
      _
    $region15: #{tpu_custom_call.1} parent=1 // pred_check_branch
      %216 = sbr.rel (0) target = $region17
    $region16: #{tpu_custom_call.1} parent=1 // pred_region
      %218 = vsyncadd [#allocation3], 0
      %s220 = sshll.u32 [#allocation2], 4
      %s221 = int_to_ptr.vmem [resolvable:$true] %s220
      %s222 = sshll.u32 %s3, 4
      %s223 = int_to_ptr.hbm [resolvable:$true] %s222
      %225 = dma.vmem_to_hbm [thread:$0]  %s221, 128, %s223, [#allocation3]
    $region17: #{tpu_custom_call.1} parent=1 // pred_fallthru
      _
    // Predicated region
    $region18: #{tpu_custom_call.1} parent=1 // pred_check
      _
    $region19: #{tpu_custom_call.1} parent=1 // pred_check_branch
      %227 = sbr.rel (0) target = $region21
    $region20: #{tpu_custom_call.1} parent=1 // pred_region
      %229 = dma.done [#allocation3], 128
    $region21: #{tpu_custom_call.1} parent=1 // pred_fallthru
      _
    %230 = vsyncpa [#allocation3], 1

</llo_original>
